<compile_context>
chip_gen: v7x
topology: tpu7x:2x2x1
jax: 0.10.0
libtpu: 0.0.40
codegen_flags: <defaults>
</compile_context>

<pallas_src>
import functools

import jax
import jax.numpy as jnp
from jax.experimental import pallas as pl
from jax.experimental.pallas import tpu as pltpu


def _round_up(v, m):
    return (v + m - 1) // m * m


def _pe_kernel(x_ref, o_ref, *, freqs, include_input, use_double_angle):
    """x_ref: [d, bc] block of x^T.  o_ref: [d_out, bc] block (term-major rows)."""
    d = x_ref.shape[0]
    x_in = x_ref[...]                       # [d, bc], input dtype
    x = x_in.astype(jnp.float32)            # compute in f32

    row = 0
    if include_input:
        o_ref[0:d, :] = x_in.astype(o_ref.dtype)
        row = d

    s_prev = None
    c_prev = None
    for k, f in enumerate(freqs):           # freqs are static python floats -> unrolled
        if use_double_angle and (k % 2 == 1):
            # log-sampling: freqs[k] == 2 * freqs[k-1]; double-angle on the VPU
            # instead of two more EUP transcendentals.
            s = 2.0 * s_prev * c_prev
            c = 1.0 - 2.0 * s_prev * s_prev
        else:
            xf = x * f
            s = jnp.sin(xf)
            c = jnp.cos(xf)
        # Direct per-term stores (no concatenate / no extra intermediates).
        o_ref[row:row + d, :] = s.astype(o_ref.dtype)
        o_ref[row + d:row + 2 * d, :] = c.astype(o_ref.dtype)
        row += 2 * d
        s_prev, c_prev = s, c


def position_embedding(
    x,
    num_encoding_functions=6,
    include_input=True,
    log_sampling=True,
    block_cols=16384,
    use_double_angle=True,
    out_dtype=None,
):
    """x: (..., D).  Returns (..., D * (include_input + 2*num_encoding_functions))."""
    orig_shape = x.shape
    d = orig_shape[-1]
    x2 = x.reshape(-1, d)
    n = x2.shape[0]
    out_dtype = x.dtype if out_dtype is None else out_dtype

    # Frequency bands computed with plain Python math (no device op / host sync).
    if log_sampling:
        freqs = tuple(float(2.0 ** k) for k in range(num_encoding_functions))
    else:
        lo = 1.0
        hi = float(2.0 ** (num_encoding_functions - 1))
        if num_encoding_functions <= 1:
            freqs = (lo,) * num_encoding_functions
        else:
            step = (hi - lo) / (num_encoding_functions - 1)
            freqs = tuple(lo + i * step for i in range(num_encoding_functions))

    n_terms = (1 if include_input else 0) + 2 * num_encoding_functions
    d_out = d * n_terms

    if n_terms == 1 and include_input:
        # Matches torch's `return out[0]` fast path.
        return x

    # Transposed, lane-dense layout: N on the 128-lane axis.
    xt = x2.T                                            # [d, n]
    bc = max(128, min(int(block_cols), _round_up(n, 128)))
    bc = _round_up(bc, 128)
    n_pad = _round_up(n, bc)
    if n_pad != n:
        xt = jnp.pad(xt, ((0, 0), (0, n_pad - n)))       # pad lanes; sliced off below

    kernel = functools.partial(
        _pe_kernel,
        freqs=freqs,
        include_input=include_input,
        use_double_angle=bool(use_double_angle and log_sampling
                              and num_encoding_functions >= 2),
    )

    ot = pl.pallas_call(
        kernel,
        out_shape=jax.ShapeDtypeStruct((d_out, n_pad), out_dtype),
        grid_spec=pltpu.PrefetchScalarGridSpec(
            num_scalar_prefetch=0,
            grid=(n_pad // bc,),
            # First block dim equals the full array dim (d / d_out), last dim is a
            # multiple of 128 -> satisfies the (8,128) tiling rule and gives
            # lane-dense, unmasked stores.
            in_specs=[pl.BlockSpec((d, bc), lambda i: (0, i))],
            out_specs=pl.BlockSpec((d_out, bc), lambda i: (0, i)),
        ),
        compiler_params=pltpu.CompilerParams(
            dimension_semantics=("parallel",)),
    )(xt)

    # Back to the torch layout: [n, d_out] with term-major concat order.
    # TODO(synk): if the downstream MLP can consume the [d_out, N] layout directly
    # (it feeds a matmul anyway), skip this transpose to save 2x output HBM traffic.
    out = ot[:, :n].T
    return out.reshape(orig_shape[:-1] + (d_out,))


def position_embedding_ref(x, num_encoding_functions=6, include_input=True,
                           log_sampling=True):
    """Pure-JAX reference mirroring the torch forward, for correctness check."""
    if log_sampling:
        freq_bands = 2.0 ** jnp.linspace(
            0.0, num_encoding_functions - 1, num_encoding_functions
        )
    else:
        freq_bands = jnp.linspace(
            2.0 ** 0.0, 2.0 ** (num_encoding_functions - 1), num_encoding_functions
        )
    out = [x] if include_input else []
    for f in freq_bands:
        for fn in (jnp.sin, jnp.cos):
            out.append(fn(x * f))
    return out[0] if len(out) == 1 else jnp.concatenate(out, axis=-1)


if __name__ == "__main__":
    key = jax.random.PRNGKey(0)
    # N=128 points with D=3 coordinates (typical NeRF positional-encoding input).
    x = jax.random.normal(key, (128, 3), dtype=jnp.float32)
    ref = position_embedding_ref(x)

    # Default (double-angle) path: exact anchors every 2 octaves keep the extra
    # error in the low 1e-6 range; use a 5e-5 absolute bound.
    out = jax.block_until_ready(position_embedding(x))
    assert out.shape == (128, 3 * (1 + 2 * 6)), out.shape
    assert jnp.allclose(out, ref, atol=5e-5, rtol=0.0)

    # Exact-transcendental path: bit-level parity with the previous kernel.
    out_exact = jax.block_until_ready(position_embedding(x, use_double_angle=False))
    assert jnp.allclose(out_exact, ref, atol=1e-5, rtol=1e-5)

    # Leading batch dims + N not a multiple of the lane tile (exercises the
    # pad/slice path and arbitrary-N support).
    x2 = jax.random.normal(jax.random.PRNGKey(0), (2, 70, 3), dtype=jnp.float32)
    out2 = jax.block_until_ready(position_embedding(x2, block_cols=256))
    ref2 = position_embedding_ref(x2)
    assert out2.shape == (2, 70, 39), out2.shape
    assert jnp.allclose(out2, ref2, atol=5e-5, rtol=0.0)

    print("KERNEL_OK")
</pallas_src>

<mosaic_0001>
module attributes {stable_mosaic.version = 11 : i64} {
  func.func @_pe_kernel(%arg0: i32, %arg1: memref<3x128xf32, #tpu.memory_space<vmem>>, %arg2: memref<39x128xf32, #tpu.memory_space<vmem>>) attributes {dimension_semantics = [#tpu.dimension_semantics<parallel>], iteration_bounds = array<i64: 1>, scalar_prefetch = 0 : i64, scratch_operands = 0 : i64, tpu.core_type = #tpu.core_type<tc>, window_params = [{transform_indices = @transform_0, window_bounds = array<i64: 3, 128>}, {transform_indices = @transform_1, window_bounds = array<i64: 39, 128>}]} {
    %c0 = arith.constant 0 : index
    %c0_0 = arith.constant 0 : index
    %0 = vector.load %arg1[%c0, %c0_0] : memref<3x128xf32, #tpu.memory_space<vmem>>, vector<3x128xf32>
    %c0_1 = arith.constant 0 : index
    %c0_2 = arith.constant 0 : index
    %1 = vector.load %arg2[%c0_1, %c0_2] : memref<39x128xf32, #tpu.memory_space<vmem>>, vector<3x128xf32>
    tpu.vector_store %arg2[%c0_1, %c0_2], %0 {strides = array<i32>} : memref<39x128xf32, #tpu.memory_space<vmem>>, vector<3x128xf32>,
    %cst = arith.constant 1.000000e+00 : f32
    %2 = vector.broadcast %cst : f32 to vector<3x128xf32>
    %3 = arith.mulf %0, %2 : vector<3x128xf32>
    %4 = math.sin %3 : vector<3x128xf32>
    %5 = math.cos %3 : vector<3x128xf32>
    %c3 = arith.constant 3 : index
    %c0_3 = arith.constant 0 : index
    %6 = vector.load %arg2[%c3, %c0_3] : memref<39x128xf32, #tpu.memory_space<vmem>>, vector<3x128xf32>
    tpu.vector_store %arg2[%c3, %c0_3], %4 {strides = array<i32>} : memref<39x128xf32, #tpu.memory_space<vmem>>, vector<3x128xf32>,
    %c6 = arith.constant 6 : index
    %c0_4 = arith.constant 0 : index
    %7 = vector.load %arg2[%c6, %c0_4] : memref<39x128xf32, #tpu.memory_space<vmem>>, vector<3x128xf32>
    tpu.vector_store %arg2[%c6, %c0_4], %5 {strides = array<i32>} : memref<39x128xf32, #tpu.memory_space<vmem>>, vector<3x128xf32>,
    %cst_5 = arith.constant 2.000000e+00 : f32
    %8 = vector.broadcast %cst_5 : f32 to vector<3x128xf32>
    %9 = arith.mulf %8, %4 : vector<3x128xf32>
    %10 = arith.mulf %9, %5 : vector<3x128xf32>
    %cst_6 = arith.constant 2.000000e+00 : f32
    %11 = vector.broadcast %cst_6 : f32 to vector<3x128xf32>
    %12 = arith.mulf %11, %4 : vector<3x128xf32>
    %13 = arith.mulf %12, %4 : vector<3x128xf32>
    %cst_7 = arith.constant 1.000000e+00 : f32
    %14 = vector.broadcast %cst_7 : f32 to vector<3x128xf32>
    %15 = arith.subf %14, %13 : vector<3x128xf32>
    %c9 = arith.constant 9 : index
    %c0_8 = arith.constant 0 : index
    %16 = vector.load %arg2[%c9, %c0_8] : memref<39x128xf32, #tpu.memory_space<vmem>>, vector<3x128xf32>
    tpu.vector_store %arg2[%c9, %c0_8], %10 {strides = array<i32>} : memref<39x128xf32, #tpu.memory_space<vmem>>, vector<3x128xf32>,
    %c12 = arith.constant 12 : index
    %c0_9 = arith.constant 0 : index
    %17 = vector.load %arg2[%c12, %c0_9] : memref<39x128xf32, #tpu.memory_space<vmem>>, vector<3x128xf32>
    tpu.vector_store %arg2[%c12, %c0_9], %15 {strides = array<i32>} : memref<39x128xf32, #tpu.memory_space<vmem>>, vector<3x128xf32>,
    %cst_10 = arith.constant 4.000000e+00 : f32
    %18 = vector.broadcast %cst_10 : f32 to vector<3x128xf32>
    %19 = arith.mulf %0, %18 : vector<3x128xf32>
    %20 = math.sin %19 : vector<3x128xf32>
    %21 = math.cos %19 : vector<3x128xf32>
    %c15 = arith.constant 15 : index
    %c0_11 = arith.constant 0 : index
    %22 = vector.load %arg2[%c15, %c0_11] : memref<39x128xf32, #tpu.memory_space<vmem>>, vector<3x128xf32>
    tpu.vector_store %arg2[%c15, %c0_11], %20 {strides = array<i32>} : memref<39x128xf32, #tpu.memory_space<vmem>>, vector<3x128xf32>,
    %c18 = arith.constant 18 : index
    %c0_12 = arith.constant 0 : index
    %23 = vector.load %arg2[%c18, %c0_12] : memref<39x128xf32, #tpu.memory_space<vmem>>, vector<3x128xf32>
    tpu.vector_store %arg2[%c18, %c0_12], %21 {strides = array<i32>} : memref<39x128xf32, #tpu.memory_space<vmem>>, vector<3x128xf32>,
    %cst_13 = arith.constant 2.000000e+00 : f32
    %24 = vector.broadcast %cst_13 : f32 to vector<3x128xf32>
    %25 = arith.mulf %24, %20 : vector<3x128xf32>
    %26 = arith.mulf %25, %21 : vector<3x128xf32>
    %cst_14 = arith.constant 2.000000e+00 : f32
    %27 = vector.broadcast %cst_14 : f32 to vector<3x128xf32>
    %28 = arith.mulf %27, %20 : vector<3x128xf32>
    %29 = arith.mulf %28, %20 : vector<3x128xf32>
    %cst_15 = arith.constant 1.000000e+00 : f32
    %30 = vector.broadcast %cst_15 : f32 to vector<3x128xf32>
    %31 = arith.subf %30, %29 : vector<3x128xf32>
    %c21 = arith.constant 21 : index
    %c0_16 = arith.constant 0 : index
    %32 = vector.load %arg2[%c21, %c0_16] : memref<39x128xf32, #tpu.memory_space<vmem>>, vector<3x128xf32>
    tpu.vector_store %arg2[%c21, %c0_16], %26 {strides = array<i32>} : memref<39x128xf32, #tpu.memory_space<vmem>>, vector<3x128xf32>,
    %c24 = arith.constant 24 : index
    %c0_17 = arith.constant 0 : index
    %33 = vector.load %arg2[%c24, %c0_17] : memref<39x128xf32, #tpu.memory_space<vmem>>, vector<3x128xf32>
    tpu.vector_store %arg2[%c24, %c0_17], %31 {strides = array<i32>} : memref<39x128xf32, #tpu.memory_space<vmem>>, vector<3x128xf32>,
    %cst_18 = arith.constant 1.600000e+01 : f32
    %34 = vector.broadcast %cst_18 : f32 to vector<3x128xf32>
    %35 = arith.mulf %0, %34 : vector<3x128xf32>
    %36 = math.sin %35 : vector<3x128xf32>
    %37 = math.cos %35 : vector<3x128xf32>
    %c27 = arith.constant 27 : index
    %c0_19 = arith.constant 0 : index
    %38 = vector.load %arg2[%c27, %c0_19] : memref<39x128xf32, #tpu.memory_space<vmem>>, vector<3x128xf32>
    tpu.vector_store %arg2[%c27, %c0_19], %36 {strides = array<i32>} : memref<39x128xf32, #tpu.memory_space<vmem>>, vector<3x128xf32>,
    %c30 = arith.constant 30 : index
    %c0_20 = arith.constant 0 : index
    %39 = vector.load %arg2[%c30, %c0_20] : memref<39x128xf32, #tpu.memory_space<vmem>>, vector<3x128xf32>
    tpu.vector_store %arg2[%c30, %c0_20], %37 {strides = array<i32>} : memref<39x128xf32, #tpu.memory_space<vmem>>, vector<3x128xf32>,
    %cst_21 = arith.constant 2.000000e+00 : f32
    %40 = vector.broadcast %cst_21 : f32 to vector<3x128xf32>
    %41 = arith.mulf %40, %36 : vector<3x128xf32>
    %42 = arith.mulf %41, %37 : vector<3x128xf32>
    %cst_22 = arith.constant 2.000000e+00 : f32
    %43 = vector.broadcast %cst_22 : f32 to vector<3x128xf32>
    %44 = arith.mulf %43, %36 : vector<3x128xf32>
    %45 = arith.mulf %44, %36 : vector<3x128xf32>
    %cst_23 = arith.constant 1.000000e+00 : f32
    %46 = vector.broadcast %cst_23 : f32 to vector<3x128xf32>
    %47 = arith.subf %46, %45 : vector<3x128xf32>
    %c33 = arith.constant 33 : index
    %c0_24 = arith.constant 0 : index
    %48 = vector.load %arg2[%c33, %c0_24] : memref<39x128xf32, #tpu.memory_space<vmem>>, vector<3x128xf32>
    tpu.vector_store %arg2[%c33, %c0_24], %42 {strides = array<i32>} : memref<39x128xf32, #tpu.memory_space<vmem>>, vector<3x128xf32>,
    %c36 = arith.constant 36 : index
    %c0_25 = arith.constant 0 : index
    %49 = vector.load %arg2[%c36, %c0_25] : memref<39x128xf32, #tpu.memory_space<vmem>>, vector<3x128xf32>
    tpu.vector_store %arg2[%c36, %c0_25], %47 {strides = array<i32>} : memref<39x128xf32, #tpu.memory_space<vmem>>, vector<3x128xf32>,
    return
  }
  func.func @transform_0(%arg0: i32) -> (i32, i32) {
    %c0_i32 = arith.constant 0 : i32
    %c0_i32_0 = arith.constant 0 : i32
    return %c0_i32, %arg0 : i32, i32
  }
  func.func @transform_1(%arg0: i32) -> (i32, i32) {
    %c0_i32 = arith.constant 0 : i32
    %c0_i32_0 = arith.constant 0 : i32
    return %c0_i32, %arg0 : i32, i32
  }
}

</mosaic_0001>

<llo_original>
// kernel: tpu_custom_call.1
$region0: #{tpu_custom_call.1}
  #allocation0 [shape = 'u32[]', space=smem, size = 0x4, offset = 0x4, fixed_abs, tag = 'smem constant byte address 0x4 - core index']
  #allocation1 [shape = 'u32[144,128]{1,0:T(1,128)}', space=vmem, size = 0x12000, scoped, tag = 'internal scratch']
  %s0 = inlined_call_operand.hbm [shape: f32[3,128], index: 0, kind: input, shape index: {}]
  %s1 = inlined_call_operand.hbm [shape: f32[39,128], index: 1, kind: output, shape index: {}]
  %s2 = sld [smem:[#allocation0]]
  $region18: #{tpu_custom_call.1} parent=0
    _
  %s4 = ssub.s32 1, %s2
  %s5 = scalar_select 0, %s4, %s2
  $region1: #{tpu_custom_call.1} parent=0
    #allocation2 [shape = 'u8[2048]{0}', space=vmem, size = 0x800, scoped, tag = 'input window, operand 0, single buffered']
    #allocation3 [shape = 's32[1]{0}', space=sflag, size = 0x4, scoped, tag = 'scoped memory for tpu_custom_call.1']
    #allocation4 [shape = 's32[1]{0}', space=sflag, size = 0x4, scoped, tag = 'scoped memory for tpu_custom_call.1']
    #allocation5 [shape = 'u8[20480]{0}', space=vmem, size = 0x5000, scoped, tag = 'output window, operand 0, single buffered']
    %6 = vsyncpa [#allocation3], 0
    %7 = vsyncpa [#allocation4], 0
    // Predicated region
    $region2: #{tpu_custom_call.1} parent=1 // pred_check
      _
    $region3: #{tpu_custom_call.1} parent=1 // pred_check_branch
      %9 = sbr.rel (0) target = $region5
    $region4: #{tpu_custom_call.1} parent=1 // pred_region
      %s11 = ssub.s32 64, 64
      %12 = vsyncadd [#allocation3], %s11
      %s14 = sshll.u32 [#allocation2], 4
      %s15 = int_to_ptr.vmem [resolvable:$true] %s14
      %17 = dma.hbm_to_vmem [thread:$0]  %s0, 64, %s15, [#allocation3]
    $region5: #{tpu_custom_call.1} parent=1 // pred_fallthru
      _
    // Predicated region
    $region6: #{tpu_custom_call.1} parent=1 // pred_check
      _
    $region7: #{tpu_custom_call.1} parent=1 // pred_check_branch
      %19 = sbr.rel (0) target = $region9
    $region8: #{tpu_custom_call.1} parent=1 // pred_region
      %20 = dma.done [#allocation3], 64
    $region9: #{tpu_custom_call.1} parent=1 // pred_fallthru
      _
    %v21 = vld [vmem:[#allocation2] sm:$0x7]
    %22 = vst [vmem:[#allocation5] sm:$0x7] %v21
    %v23 = vand.u32 2147483647, %v21
    %vm24 = vcmp.le.f32.partialorder %v23, 0.7853982
    %vm25 = vcmp.lt.s32.totalorder %v21, 0
    %v26 = vand.u32 %v21, 2139095040
    %v27 = vshrl.u32 %v26, 23
    %v28 = vsub.s32 %v27, 127
    %v29 = vand.u32 2147483647, %v21
    %v30 = vand.u32 %v29, 8388607
    %v31 = vor.u32 %v30, 8388608
    %v32 = vsub.s32 0, %v31
    %v33 = vadd.s32 %v28, 1
    %vm34 = vcmp.gt.s32.totalorder %v33, 0
    %v35 = vsel %vm34, %v33, 0
    %v36 = vshrl.u32 %v35, 5
    %v37 = vand.u32 %v35, 31
    %v38 = vsub.s32 32, %v37
    %v39 = vshrl.u32 683565275, %v38
    %v40 = vshll.u32 683565275, %v37
    %v41 = vshrl.u32 2475754826, %v38
    %v42 = vor.u32 %v40, %v41
    %v43 = vshll.u32 2475754826, %v37
    %v44 = vshrl.u32 2131351028, %v38
    %v45 = vor.u32 %v43, %v44
    %v46 = vshll.u32 2131351028, %v37
    %v47 = vshrl.u32 2102212464, %v38
    %v48 = vor.u32 %v46, %v47
    %v49 = vshll.u32 2102212464, %v37
    %v50 = vshrl.u32 920167782, %v38
    %v51 = vor.u32 %v49, %v50
    %v52 = vshll.u32 920167782, %v37
    %v53 = vshrl.u32 1326507024, %v38
    %v54 = vor.u32 %v52, %v53
    %vm55 = vcmp.lt.s32.totalorder %v36, 1
    %vm56 = vcmp.lt.s32.totalorder %v36, 2
    %vm57 = vcmp.lt.s32.totalorder %v36, 3
    %vm58 = vcmp.lt.s32.totalorder %v36, 4
    %v59 = vsel %vm55, %v39, %v42
    %v60 = vsel %vm58, %v48, 2102212464
    %v61 = vsel %vm57, %v45, %v60
    %v62 = vsel %vm56, %v59, %v61
    %v63 = vsel %vm55, %v42, %v45
    %v64 = vsel %vm58, %v51, 920167782
    %v65 = vsel %vm57, %v48, %v64
    %v66 = vsel %vm56, %v63, %v65
    %v67 = vsel %vm55, %v45, %v48
    %v68 = vsel %vm58, %v54, 1326507024
    %v69 = vsel %vm57, %v51, %v68
    %v70 = vsel %vm56, %v67, %v69
    %v71 = vshll.u32 %v31, 8
    %v72 = vmul.u32.u64.compose %v71, %v70
    %v73 = vextract.low.u32 %v72
    %v74 = vextract.high.u32 %v72
    %v75 = vmul.u32.u64.compose %v71, %v66
    %v76 = vextract.low.u32 %v75
    %v77 = vextract.high.u32 %v75
    %v78 = vmul.u32 %v71, %v62
    %v79 = vadd.s32 %v74, %v76
    %vm80 = vc.u32 %v74, %v76
    %v81 = vadd.s32 %v77, 1
    %v82 = vsel %vm80, %v81, %v77
    %v83 = vadd.s32 %v78, %v82
    %v84 = vadd.s32 %v83, 536870912
    %v85 = vshrl.u32 %v84, 30
    %v86 = vshll.u32 %v85, 30
    %v87 = vsub.s32 %v83, %v86
    %vm88 = vcmp.lt.s32.totalorder %v87, 0
    %v89 = vsub.s32 0, %v87
    %v90 = vsel %vm88, %v89, %v87
    %v91 = vclz %v90
    %v92 = vsub.s32 %v91, 2
    %vm93 = vcmp.gt.s32.totalorder 0, %v92
    %v94 = vsel %vm93, 0, %v92
    %v95 = vsub.s32 32, %v94
    %v96 = vshll.u32 %v87, %v94
    %v97 = vshrl.u32 %v79, %v95
    %v98 = vor.u32 %v96, %v97
    %v99 = vsub.s32 4294967266, %v94
    %v100 = vadd.s32 %v99, 127
    %v101 = vshll.u32 %v100, 23
    %v102 = vor.u32 4788187, %v101
    %v103 = vand.u32 2147483647, %v102
    %v105 = vcvt.s32.f32 %v98
    %v106 = vmul.f32 %v105, %v103
    %v107 = vxor.u32 %v106, 2147483648
    %v108 = vsel %vm25, %v107, %v106
    %v109 = vsub.s32 4, %v85
    %v110 = vsel %vm25, %v109, %v85
    %v111 = vsel %vm24, %v21, %v108
    %v112 = vsel %vm24, 0, %v110
    %v113 = vcosq.f32.pop %v111
    %v114 = vsinq.f32.pop %v111
    %vm115 = vweird.f32 %v21
    %v116 = vadd.s32 %v112, 3
    %v117 = vand.u32 %v116, 3
    %vm118 = vcmp.lt.s32.totalorder %v117, 2
    %vm119 = vcmp.eq.s32.totalorder %v117, 0
    %v120 = vxor.u32 %v114, 2147483648
    %v121 = vsel %vm119, %v113, %v120
    %vm122 = vcmp.eq.s32.totalorder %v117, 2
    %v123 = vxor.u32 %v113, 2147483648
    %v124 = vsel %vm122, %v123, %v114
    %v125 = vsel %vm118, %v121, %v124
    %v126 = vsel %vm115, nan, %v125
    %v127 = vand.u32 2147483647, %v21
    %vm128 = vcmp.le.f32.partialorder %v127, 0.7853982
    %vm129 = vcmp.lt.s32.totalorder %v21, 0
    %v130 = vand.u32 %v21, 2139095040
    %v131 = vshrl.u32 %v130, 23
    %v132 = vsub.s32 %v131, 127
    %v133 = vand.u32 2147483647, %v21
    %v134 = vand.u32 %v133, 8388607
    %v135 = vor.u32 %v134, 8388608
    %v136 = vsub.s32 0, %v135
    %v137 = vadd.s32 %v132, 1
    %vm138 = vcmp.gt.s32.totalorder %v137, 0
    %v139 = vsel %vm138, %v137, 0
    %v140 = vshrl.u32 %v139, 5
    %v141 = vand.u32 %v139, 31
    %v142 = vsub.s32 32, %v141
    %v143 = vshrl.u32 683565275, %v142
    %v144 = vshll.u32 683565275, %v141
    %v145 = vshrl.u32 2475754826, %v142
    %v146 = vor.u32 %v144, %v145
    %v147 = vshll.u32 2475754826, %v141
    %v148 = vshrl.u32 2131351028, %v142
    %v149 = vor.u32 %v147, %v148
    %v150 = vshll.u32 2131351028, %v141
    %v151 = vshrl.u32 2102212464, %v142
    %v152 = vor.u32 %v150, %v151
    %v153 = vshll.u32 2102212464, %v141
    %v154 = vshrl.u32 920167782, %v142
    %v155 = vor.u32 %v153, %v154
    %v156 = vshll.u32 920167782, %v141
    %v157 = vshrl.u32 1326507024, %v142
    %v158 = vor.u32 %v156, %v157
    %vm159 = vcmp.lt.s32.totalorder %v140, 1
    %vm160 = vcmp.lt.s32.totalorder %v140, 2
    %vm161 = vcmp.lt.s32.totalorder %v140, 3
    %vm162 = vcmp.lt.s32.totalorder %v140, 4
    %v163 = vsel %vm159, %v143, %v146
    %v164 = vsel %vm162, %v152, 2102212464
    %v165 = vsel %vm161, %v149, %v164
    %v166 = vsel %vm160, %v163, %v165
    %v167 = vsel %vm159, %v146, %v149
    %v168 = vsel %vm162, %v155, 920167782
    %v169 = vsel %vm161, %v152, %v168
    %v170 = vsel %vm160, %v167, %v169
    %v171 = vsel %vm159, %v149, %v152
    %v172 = vsel %vm162, %v158, 1326507024
    %v173 = vsel %vm161, %v155, %v172
    %v174 = vsel %vm160, %v171, %v173
    %v175 = vshll.u32 %v135, 8
    %v176 = vmul.u32.u64.compose %v175, %v174
    %v177 = vextract.low.u32 %v176
    %v178 = vextract.high.u32 %v176
    %v179 = vmul.u32.u64.compose %v175, %v170
    %v180 = vextract.low.u32 %v179
    %v181 = vextract.high.u32 %v179
    %v182 = vmul.u32 %v175, %v166
    %v183 = vadd.s32 %v178, %v180
    %vm184 = vc.u32 %v178, %v180
    %v185 = vadd.s32 %v181, 1
    %v186 = vsel %vm184, %v185, %v181
    %v187 = vadd.s32 %v182, %v186
    %v188 = vadd.s32 %v187, 536870912
    %v189 = vshrl.u32 %v188, 30
    %v190 = vshll.u32 %v189, 30
    %v191 = vsub.s32 %v187, %v190
    %vm192 = vcmp.lt.s32.totalorder %v191, 0
    %v193 = vsub.s32 0, %v191
    %v194 = vsel %vm192, %v193, %v191
    %v195 = vclz %v194
    %v196 = vsub.s32 %v195, 2
    %vm197 = vcmp.gt.s32.totalorder 0, %v196
    %v198 = vsel %vm197, 0, %v196
    %v199 = vsub.s32 32, %v198
    %v200 = vshll.u32 %v191, %v198
    %v201 = vshrl.u32 %v183, %v199
    %v202 = vor.u32 %v200, %v201
    %v203 = vsub.s32 4294967266, %v198
    %v204 = vadd.s32 %v203, 127
    %v205 = vshll.u32 %v204, 23
    %v206 = vor.u32 4788187, %v205
    %v207 = vand.u32 2147483647, %v206
    %v209 = vcvt.s32.f32 %v202
    %v210 = vmul.f32 %v209, %v207
    %v211 = vxor.u32 %v210, 2147483648
    %v212 = vsel %vm129, %v211, %v210
    %v213 = vsub.s32 4, %v189
    %v214 = vsel %vm129, %v213, %v189
    %v215 = vsel %vm128, %v21, %v212
    %v216 = vsel %vm128, 0, %v214
    %v217 = vcosq.f32.pop %v215
    %v218 = vsinq.f32.pop %v215
    %vm219 = vweird.f32 %v21
    %v220 = vand.u32 %v216, 3
    %vm221 = vcmp.lt.s32.totalorder %v220, 2
    %vm222 = vcmp.eq.s32.totalorder %v220, 0
    %v223 = vxor.u32 %v218, 2147483648
    %v224 = vsel %vm222, %v217, %v223
    %vm225 = vcmp.eq.s32.totalorder %v220, 2
    %v226 = vxor.u32 %v217, 2147483648
    %v227 = vsel %vm225, %v226, %v218
    %v228 = vsel %vm221, %v224, %v227
    %v229 = vsel %vm219, nan, %v228
    %230 = vst [vmem:[#allocation5 + $0x3] sm:$0x7] %v126
    %231 = vst [vmem:[#allocation5 + $0x6] sm:$0x7] %v229
    %v232 = vmul.f32 %v126, 2.0
    %v233 = vmul.f32 %v232, %v229
    %v234 = vmul.f32 %v232, %v126
    %v235 = vsub.f32 1.0, %v234
    %236 = vst [vmem:[#allocation5 + $0x9] sm:$0x7] %v233
    %237 = vst [vmem:[#allocation5 + $0xc] sm:$0x7] %v235
    %v238 = vmul.f32 %v21, 4.0
    %v239 = vand.u32 2147483647, %v238
    %vm240 = vcmp.le.f32.partialorder %v239, 0.7853982
    %vm241 = vcmp.lt.s32.totalorder %v238, 0
    %v242 = vand.u32 %v238, 2139095040
    %v243 = vshrl.u32 %v242, 23
    %v244 = vsub.s32 %v243, 127
    %v245 = vand.u32 2147483647, %v238
    %v246 = vand.u32 %v245, 8388607
    %v247 = vor.u32 %v246, 8388608
    %v248 = vsub.s32 0, %v247
    %v249 = vadd.s32 %v244, 1
    %vm250 = vcmp.gt.s32.totalorder %v249, 0
    %v251 = vsel %vm250, %v249, 0
    %v252 = vshrl.u32 %v251, 5
    %v253 = vand.u32 %v251, 31
    %v254 = vsub.s32 32, %v253
    %v255 = vshrl.u32 683565275, %v254
    %v256 = vshll.u32 683565275, %v253
    %v257 = vshrl.u32 2475754826, %v254
    %v258 = vor.u32 %v256, %v257
    %v259 = vshll.u32 2475754826, %v253
    %v260 = vshrl.u32 2131351028, %v254
    %v261 = vor.u32 %v259, %v260
    %v262 = vshll.u32 2131351028, %v253
    %v263 = vshrl.u32 2102212464, %v254
    %v264 = vor.u32 %v262, %v263
    %v265 = vshll.u32 2102212464, %v253
    %v266 = vshrl.u32 920167782, %v254
    %v267 = vor.u32 %v265, %v266
    %v268 = vshll.u32 920167782, %v253
    %v269 = vshrl.u32 1326507024, %v254
    %v270 = vor.u32 %v268, %v269
    %vm271 = vcmp.lt.s32.totalorder %v252, 1
    %vm272 = vcmp.lt.s32.totalorder %v252, 2
    %vm273 = vcmp.lt.s32.totalorder %v252, 3
    %vm274 = vcmp.lt.s32.totalorder %v252, 4
    %v275 = vsel %vm271, %v255, %v258
    %v276 = vsel %vm274, %v264, 2102212464
    %v277 = vsel %vm273, %v261, %v276
    %v278 = vsel %vm272, %v275, %v277
    %v279 = vsel %vm271, %v258, %v261
    %v280 = vsel %vm274, %v267, 920167782
    %v281 = vsel %vm273, %v264, %v280
    %v282 = vsel %vm272, %v279, %v281
    %v283 = vsel %vm271, %v261, %v264
    %v284 = vsel %vm274, %v270, 1326507024
    %v285 = vsel %vm273, %v267, %v284
    %v286 = vsel %vm272, %v283, %v285
    %v287 = vshll.u32 %v247, 8
    %v288 = vmul.u32.u64.compose %v287, %v286
    %v289 = vextract.low.u32 %v288
    %v290 = vextract.high.u32 %v288
    %v291 = vmul.u32.u64.compose %v287, %v282
    %v292 = vextract.low.u32 %v291
    %v293 = vextract.high.u32 %v291
    %v294 = vmul.u32 %v287, %v278
    %v295 = vadd.s32 %v290, %v292
    %vm296 = vc.u32 %v290, %v292
    %v297 = vadd.s32 %v293, 1
    %v298 = vsel %vm296, %v297, %v293
    %v299 = vadd.s32 %v294, %v298
    %v300 = vadd.s32 %v299, 536870912
    %v301 = vshrl.u32 %v300, 30
    %v302 = vshll.u32 %v301, 30
    %v303 = vsub.s32 %v299, %v302
    %vm304 = vcmp.lt.s32.totalorder %v303, 0
    %v305 = vsub.s32 0, %v303
    %v306 = vsel %vm304, %v305, %v303
    %v307 = vclz %v306
    %v308 = vsub.s32 %v307, 2
    %vm309 = vcmp.gt.s32.totalorder 0, %v308
    %v310 = vsel %vm309, 0, %v308
    %v311 = vsub.s32 32, %v310
    %v312 = vshll.u32 %v303, %v310
    %v313 = vshrl.u32 %v295, %v311
    %v314 = vor.u32 %v312, %v313
    %v315 = vsub.s32 4294967266, %v310
    %v316 = vadd.s32 %v315, 127
    %v317 = vshll.u32 %v316, 23
    %v318 = vor.u32 4788187, %v317
    %v319 = vand.u32 2147483647, %v318
    %v321 = vcvt.s32.f32 %v314
    %v322 = vmul.f32 %v321, %v319
    %v323 = vxor.u32 %v322, 2147483648
    %v324 = vsel %vm241, %v323, %v322
    %v325 = vsub.s32 4, %v301
    %v326 = vsel %vm241, %v325, %v301
    %v327 = vsel %vm240, %v238, %v324
    %v328 = vsel %vm240, 0, %v326
    %v329 = vcosq.f32.pop %v327
    %v330 = vsinq.f32.pop %v327
    %vm331 = vweird.f32 %v238
    %v332 = vadd.s32 %v328, 3
    %v333 = vand.u32 %v332, 3
    %vm334 = vcmp.lt.s32.totalorder %v333, 2
    %vm335 = vcmp.eq.s32.totalorder %v333, 0
    %v336 = vxor.u32 %v330, 2147483648
    %v337 = vsel %vm335, %v329, %v336
    %vm338 = vcmp.eq.s32.totalorder %v333, 2
    %v339 = vxor.u32 %v329, 2147483648
    %v340 = vsel %vm338, %v339, %v330
    %v341 = vsel %vm334, %v337, %v340
    %v342 = vsel %vm331, nan, %v341
    %v343 = vand.u32 2147483647, %v238
    %vm344 = vcmp.le.f32.partialorder %v343, 0.7853982
    %vm345 = vcmp.lt.s32.totalorder %v238, 0
    %v346 = vand.u32 %v238, 2139095040
    %v347 = vshrl.u32 %v346, 23
    %v348 = vsub.s32 %v347, 127
    %v349 = vand.u32 2147483647, %v238
    %v350 = vand.u32 %v349, 8388607
    %v351 = vor.u32 %v350, 8388608
    %v352 = vsub.s32 0, %v351
    %v353 = vadd.s32 %v348, 1
    %vm354 = vcmp.gt.s32.totalorder %v353, 0
    %v355 = vsel %vm354, %v353, 0
    %v356 = vshrl.u32 %v355, 5
    %v357 = vand.u32 %v355, 31
    %v358 = vsub.s32 32, %v357
    %v359 = vshrl.u32 683565275, %v358
    %v360 = vshll.u32 683565275, %v357
    %v361 = vshrl.u32 2475754826, %v358
    %v362 = vor.u32 %v360, %v361
    %v363 = vshll.u32 2475754826, %v357
    %v364 = vshrl.u32 2131351028, %v358
    %v365 = vor.u32 %v363, %v364
    %v366 = vshll.u32 2131351028, %v357
    %v367 = vshrl.u32 2102212464, %v358
    %v368 = vor.u32 %v366, %v367
    %v369 = vshll.u32 2102212464, %v357
    %v370 = vshrl.u32 920167782, %v358
    %v371 = vor.u32 %v369, %v370
    %v372 = vshll.u32 920167782, %v357
    %v373 = vshrl.u32 1326507024, %v358
    %v374 = vor.u32 %v372, %v373
    %vm375 = vcmp.lt.s32.totalorder %v356, 1
    %vm376 = vcmp.lt.s32.totalorder %v356, 2
    %vm377 = vcmp.lt.s32.totalorder %v356, 3
    %vm378 = vcmp.lt.s32.totalorder %v356, 4
    %v379 = vsel %vm375, %v359, %v362
    %v380 = vsel %vm378, %v368, 2102212464
    %v381 = vsel %vm377, %v365, %v380
    %v382 = vsel %vm376, %v379, %v381
    %v383 = vsel %vm375, %v362, %v365
    %v384 = vsel %vm378, %v371, 920167782
    %v385 = vsel %vm377, %v368, %v384
    %v386 = vsel %vm376, %v383, %v385
    %v387 = vsel %vm375, %v365, %v368
    %v388 = vsel %vm378, %v374, 1326507024
    %v389 = vsel %vm377, %v371, %v388
    %v390 = vsel %vm376, %v387, %v389
    %v391 = vshll.u32 %v351, 8
    %v392 = vmul.u32.u64.compose %v391, %v390
    %v393 = vextract.low.u32 %v392
    %v394 = vextract.high.u32 %v392
    %v395 = vmul.u32.u64.compose %v391, %v386
    %v396 = vextract.low.u32 %v395
    %v397 = vextract.high.u32 %v395
    %v398 = vmul.u32 %v391, %v382
    %v399 = vadd.s32 %v394, %v396
    %vm400 = vc.u32 %v394, %v396
    %v401 = vadd.s32 %v397, 1
    %v402 = vsel %vm400, %v401, %v397
    %v403 = vadd.s32 %v398, %v402
    %v404 = vadd.s32 %v403, 536870912
    %v405 = vshrl.u32 %v404, 30
    %v406 = vshll.u32 %v405, 30
    %v407 = vsub.s32 %v403, %v406
    %vm408 = vcmp.lt.s32.totalorder %v407, 0
    %v409 = vsub.s32 0, %v407
    %v410 = vsel %vm408, %v409, %v407
    %v411 = vclz %v410
    %v412 = vsub.s32 %v411, 2
    %vm413 = vcmp.gt.s32.totalorder 0, %v412
    %v414 = vsel %vm413, 0, %v412
    %v415 = vsub.s32 32, %v414
    %v416 = vshll.u32 %v407, %v414
    %v417 = vshrl.u32 %v399, %v415
    %v418 = vor.u32 %v416, %v417
    %v419 = vsub.s32 4294967266, %v414
    %v420 = vadd.s32 %v419, 127
    %v421 = vshll.u32 %v420, 23
    %v422 = vor.u32 4788187, %v421
    %v423 = vand.u32 2147483647, %v422
    %v425 = vcvt.s32.f32 %v418
    %v426 = vmul.f32 %v425, %v423
    %v427 = vxor.u32 %v426, 2147483648
    %v428 = vsel %vm345, %v427, %v426
    %v429 = vsub.s32 4, %v405
    %v430 = vsel %vm345, %v429, %v405
    %v431 = vsel %vm344, %v238, %v428
    %v432 = vsel %vm344, 0, %v430
    %v433 = vcosq.f32.pop %v431
    %v434 = vsinq.f32.pop %v431
    %vm435 = vweird.f32 %v238
    %v436 = vand.u32 %v432, 3
    %vm437 = vcmp.lt.s32.totalorder %v436, 2
    %vm438 = vcmp.eq.s32.totalorder %v436, 0
    %v439 = vxor.u32 %v434, 2147483648
    %v440 = vsel %vm438, %v433, %v439
    %vm441 = vcmp.eq.s32.totalorder %v436, 2
    %v442 = vxor.u32 %v433, 2147483648
    %v443 = vsel %vm441, %v442, %v434
    %v444 = vsel %vm437, %v440, %v443
    %v445 = vsel %vm435, nan, %v444
    %446 = vst [vmem:[#allocation5 + $0xf] sm:$0x7] %v342
    %447 = vst [vmem:[#allocation5 + $0x12] sm:$0x7] %v445
    %v448 = vmul.f32 %v342, 2.0
    %v449 = vmul.f32 %v448, %v445
    %v450 = vmul.f32 %v448, %v342
    %v451 = vsub.f32 1.0, %v450
    %452 = vst [vmem:[#allocation5 + $0x15] sm:$0x7] %v449
    %453 = vst [vmem:[#allocation5 + $0x18] sm:$0x7] %v451
    %v454 = vmul.f32 %v21, 16.0
    %v455 = vand.u32 2147483647, %v454
    %vm456 = vcmp.le.f32.partialorder %v455, 0.7853982
    %vm457 = vcmp.lt.s32.totalorder %v454, 0
    %v458 = vand.u32 %v454, 2139095040
    %v459 = vshrl.u32 %v458, 23
    %v460 = vsub.s32 %v459, 127
    %v461 = vand.u32 2147483647, %v454
    %v462 = vand.u32 %v461, 8388607
    %v463 = vor.u32 %v462, 8388608
    %v464 = vsub.s32 0, %v463
    %v465 = vadd.s32 %v460, 1
    %vm466 = vcmp.gt.s32.totalorder %v465, 0
    %v467 = vsel %vm466, %v465, 0
    %v468 = vshrl.u32 %v467, 5
    %v469 = vand.u32 %v467, 31
    %v470 = vsub.s32 32, %v469
    %v471 = vshrl.u32 683565275, %v470
    %v472 = vshll.u32 683565275, %v469
    %v473 = vshrl.u32 2475754826, %v470
    %v474 = vor.u32 %v472, %v473
    %v475 = vshll.u32 2475754826, %v469
    %v476 = vshrl.u32 2131351028, %v470
    %v477 = vor.u32 %v475, %v476
    %v478 = vshll.u32 2131351028, %v469
    %v479 = vshrl.u32 2102212464, %v470
    %v480 = vor.u32 %v478, %v479
    %v481 = vshll.u32 2102212464, %v469
    %v482 = vshrl.u32 920167782, %v470
    %v483 = vor.u32 %v481, %v482
    %v484 = vshll.u32 920167782, %v469
    %v485 = vshrl.u32 1326507024, %v470
    %v486 = vor.u32 %v484, %v485
    %vm487 = vcmp.lt.s32.totalorder %v468, 1
    %vm488 = vcmp.lt.s32.totalorder %v468, 2
    %vm489 = vcmp.lt.s32.totalorder %v468, 3
    %vm490 = vcmp.lt.s32.totalorder %v468, 4
    %v491 = vsel %vm487, %v471, %v474
    %v492 = vsel %vm490, %v480, 2102212464
    %v493 = vsel %vm489, %v477, %v492
    %v494 = vsel %vm488, %v491, %v493
    %v495 = vsel %vm487, %v474, %v477
    %v496 = vsel %vm490, %v483, 920167782
    %v497 = vsel %vm489, %v480, %v496
    %v498 = vsel %vm488, %v495, %v497
    %v499 = vsel %vm487, %v477, %v480
    %v500 = vsel %vm490, %v486, 1326507024
    %v501 = vsel %vm489, %v483, %v500
    %v502 = vsel %vm488, %v499, %v501
    %v503 = vshll.u32 %v463, 8
    %v504 = vmul.u32.u64.compose %v503, %v502
    %v505 = vextract.low.u32 %v504
    %v506 = vextract.high.u32 %v504
    %v507 = vmul.u32.u64.compose %v503, %v498
    %v508 = vextract.low.u32 %v507
    %v509 = vextract.high.u32 %v507
    %v510 = vmul.u32 %v503, %v494
    %v511 = vadd.s32 %v506, %v508
    %vm512 = vc.u32 %v506, %v508
    %v513 = vadd.s32 %v509, 1
    %v514 = vsel %vm512, %v513, %v509
    %v515 = vadd.s32 %v510, %v514
    %v516 = vadd.s32 %v515, 536870912
    %v517 = vshrl.u32 %v516, 30
    %v518 = vshll.u32 %v517, 30
    %v519 = vsub.s32 %v515, %v518
    %vm520 = vcmp.lt.s32.totalorder %v519, 0
    %v521 = vsub.s32 0, %v519
    %v522 = vsel %vm520, %v521, %v519
    %v523 = vclz %v522
    %v524 = vsub.s32 %v523, 2
    %vm525 = vcmp.gt.s32.totalorder 0, %v524
    %v526 = vsel %vm525, 0, %v524
    %v527 = vsub.s32 32, %v526
    %v528 = vshll.u32 %v519, %v526
    %v529 = vshrl.u32 %v511, %v527
    %v530 = vor.u32 %v528, %v529
    %v531 = vsub.s32 4294967266, %v526
    %v532 = vadd.s32 %v531, 127
    %v533 = vshll.u32 %v532, 23
    %v534 = vor.u32 4788187, %v533
    %v535 = vand.u32 2147483647, %v534
    %v537 = vcvt.s32.f32 %v530
    %v538 = vmul.f32 %v537, %v535
    %v539 = vxor.u32 %v538, 2147483648
    %v540 = vsel %vm457, %v539, %v538
    %v541 = vsub.s32 4, %v517
    %v542 = vsel %vm457, %v541, %v517
    %v543 = vsel %vm456, %v454, %v540
    %v544 = vsel %vm456, 0, %v542
    %v545 = vcosq.f32.pop %v543
    %v546 = vsinq.f32.pop %v543
    %vm547 = vweird.f32 %v454
    %v548 = vadd.s32 %v544, 3
    %v549 = vand.u32 %v548, 3
    %vm550 = vcmp.lt.s32.totalorder %v549, 2
    %vm551 = vcmp.eq.s32.totalorder %v549, 0
    %v552 = vxor.u32 %v546, 2147483648
    %v553 = vsel %vm551, %v545, %v552
    %vm554 = vcmp.eq.s32.totalorder %v549, 2
    %v555 = vxor.u32 %v545, 2147483648
    %v556 = vsel %vm554, %v555, %v546
    %v557 = vsel %vm550, %v553, %v556
    %v558 = vsel %vm547, nan, %v557
    %v559 = vand.u32 2147483647, %v454
    %vm560 = vcmp.le.f32.partialorder %v559, 0.7853982
    %vm561 = vcmp.lt.s32.totalorder %v454, 0
    %v562 = vand.u32 %v454, 2139095040
    %v563 = vshrl.u32 %v562, 23
    %v564 = vsub.s32 %v563, 127
    %v565 = vand.u32 2147483647, %v454
    %v566 = vand.u32 %v565, 8388607
    %v567 = vor.u32 %v566, 8388608
    %v568 = vsub.s32 0, %v567
    %v569 = vadd.s32 %v564, 1
    %vm570 = vcmp.gt.s32.totalorder %v569, 0
    %v571 = vsel %vm570, %v569, 0
    %v572 = vshrl.u32 %v571, 5
    %v573 = vand.u32 %v571, 31
    %v574 = vsub.s32 32, %v573
    %v575 = vshrl.u32 683565275, %v574
    %v576 = vshll.u32 683565275, %v573
    %v577 = vshrl.u32 2475754826, %v574
    %v578 = vor.u32 %v576, %v577
    %v579 = vshll.u32 2475754826, %v573
    %v580 = vshrl.u32 2131351028, %v574
    %v581 = vor.u32 %v579, %v580
    %v582 = vshll.u32 2131351028, %v573
    %v583 = vshrl.u32 2102212464, %v574
    %v584 = vor.u32 %v582, %v583
    %v585 = vshll.u32 2102212464, %v573
    %v586 = vshrl.u32 920167782, %v574
    %v587 = vor.u32 %v585, %v586
    %v588 = vshll.u32 920167782, %v573
    %v589 = vshrl.u32 1326507024, %v574
    %v590 = vor.u32 %v588, %v589
    %vm591 = vcmp.lt.s32.totalorder %v572, 1
    %vm592 = vcmp.lt.s32.totalorder %v572, 2
    %vm593 = vcmp.lt.s32.totalorder %v572, 3
    %vm594 = vcmp.lt.s32.totalorder %v572, 4
    %v595 = vsel %vm591, %v575, %v578
    %v596 = vsel %vm594, %v584, 2102212464
    %v597 = vsel %vm593, %v581, %v596
    %v598 = vsel %vm592, %v595, %v597
    %v599 = vsel %vm591, %v578, %v581
    %v600 = vsel %vm594, %v587, 920167782
    %v601 = vsel %vm593, %v584, %v600
    %v602 = vsel %vm592, %v599, %v601
    %v603 = vsel %vm591, %v581, %v584
    %v604 = vsel %vm594, %v590, 1326507024
    %v605 = vsel %vm593, %v587, %v604
    %v606 = vsel %vm592, %v603, %v605
    %v607 = vshll.u32 %v567, 8
    %v608 = vmul.u32.u64.compose %v607, %v606
    %v609 = vextract.low.u32 %v608
    %v610 = vextract.high.u32 %v608
    %v611 = vmul.u32.u64.compose %v607, %v602
    %v612 = vextract.low.u32 %v611
    %v613 = vextract.high.u32 %v611
    %v614 = vmul.u32 %v607, %v598
    %v615 = vadd.s32 %v610, %v612
    %vm616 = vc.u32 %v610, %v612
    %v617 = vadd.s32 %v613, 1
    %v618 = vsel %vm616, %v617, %v613
    %v619 = vadd.s32 %v614, %v618
    %v620 = vadd.s32 %v619, 536870912
    %v621 = vshrl.u32 %v620, 30
    %v622 = vshll.u32 %v621, 30
    %v623 = vsub.s32 %v619, %v622
    %vm624 = vcmp.lt.s32.totalorder %v623, 0
    %v625 = vsub.s32 0, %v623
    %v626 = vsel %vm624, %v625, %v623
    %v627 = vclz %v626
    %v628 = vsub.s32 %v627, 2
    %vm629 = vcmp.gt.s32.totalorder 0, %v628
    %v630 = vsel %vm629, 0, %v628
    %v631 = vsub.s32 32, %v630
    %v632 = vshll.u32 %v623, %v630
    %v633 = vshrl.u32 %v615, %v631
    %v634 = vor.u32 %v632, %v633
    %v635 = vsub.s32 4294967266, %v630
    %v636 = vadd.s32 %v635, 127
    %v637 = vshll.u32 %v636, 23
    %v638 = vor.u32 4788187, %v637
    %v639 = vand.u32 2147483647, %v638
    %v641 = vcvt.s32.f32 %v634
    %v642 = vmul.f32 %v641, %v639
    %v643 = vxor.u32 %v642, 2147483648
    %v644 = vsel %vm561, %v643, %v642
    %v645 = vsub.s32 4, %v621
    %v646 = vsel %vm561, %v645, %v621
    %v647 = vsel %vm560, %v454, %v644
    %v648 = vsel %vm560, 0, %v646
    %v649 = vcosq.f32.pop %v647
    %v650 = vsinq.f32.pop %v647
    %vm651 = vweird.f32 %v454
    %v652 = vand.u32 %v648, 3
    %vm653 = vcmp.lt.s32.totalorder %v652, 2
    %vm654 = vcmp.eq.s32.totalorder %v652, 0
    %v655 = vxor.u32 %v650, 2147483648
    %v656 = vsel %vm654, %v649, %v655
    %vm657 = vcmp.eq.s32.totalorder %v652, 2
    %v658 = vxor.u32 %v649, 2147483648
    %v659 = vsel %vm657, %v658, %v650
    %v660 = vsel %vm653, %v656, %v659
    %v661 = vsel %vm651, nan, %v660
    %662 = vst [vmem:[#allocation5 + $0x1b] sm:$0x7] %v558
    %663 = vst [vmem:[#allocation5 + $0x1e] sm:$0x7] %v661
    %v664 = vmul.f32 %v558, 2.0
    %v665 = vmul.f32 %v664, %v661
    %v666 = vmul.f32 %v664, %v558
    %v667 = vsub.f32 1.0, %v666
    %668 = vst [vmem:[#allocation5 + $0x21] sm:$0x7] %v665
    %669 = vst [vmem:[#allocation5 + $0x24] sm:$0x7] %v667
    // Predicated region
    $region10: #{tpu_custom_call.1} parent=1 // pred_check
      _
    $region11: #{tpu_custom_call.1} parent=1 // pred_check_branch
      %671 = sbr.rel (0) target = $region13
    $region12: #{tpu_custom_call.1} parent=1 // pred_region
      %s673 = ssub.s32 640, 640
      %674 = vsyncadd [#allocation4], %s673
      %s675 = sshll.u32 [#allocation5], 4
      %s676 = int_to_ptr.vmem [resolvable:$true] %s675
      %681 = dma.vmem_to_hbm [thread:$0]  %s676, 640, %s1, [#allocation4], 128, 128, 8
    $region13: #{tpu_custom_call.1} parent=1 // pred_fallthru
      _
    // Predicated region
    $region14: #{tpu_custom_call.1} parent=1 // pred_check
      _
    $region15: #{tpu_custom_call.1} parent=1 // pred_check_branch
      %683 = sbr.rel (0) target = $region17
    $region16: #{tpu_custom_call.1} parent=1 // pred_region
      %684 = dma.done [#allocation4], 640
    $region17: #{tpu_custom_call.1} parent=1 // pred_fallthru
      _
    %685 = vsyncpa [#allocation3], 1
    %686 = vsyncpa [#allocation4], 1

</llo_original>
